<compile_context>
chip_gen: v5e
topology: v5e:2x2
jax: 0.10.0
libtpu: 0.0.40
codegen_flags: <defaults>
</compile_context>

<pallas_src>
import math
import functools

import jax
import jax.numpy as jnp
from jax.experimental import pallas as pl
from jax.experimental.pallas import tpu as pltpu


# ----------------------------- chip / budget helpers ----------------------- #

_IS_V7X = None


def _chip_is_v7x():
    global _IS_V7X
    if _IS_V7X is None:
        try:
            _IS_V7X = "v7" in jax.devices()[0].device_kind.lower()
        except Exception:
            _IS_V7X = False
    return _IS_V7X


def _vmem_limit():
    # v7x has 64 MiB physical VMEM -> leave headroom; v5e/v6e have 128 MiB.
    return (48 << 20) if _chip_is_v7x() else (64 << 20)


def _tile_budget():
    return (16 << 20) if _chip_is_v7x() else (32 << 20)


def _round_up(n, m):
    return ((n + m - 1) // m) * m


def _row_tile(n_rows, d, itemsize):
    """Biggest row tile (multiple of 16) whose double-buffered in/out plus
    ~3 full-width f32 in-body temporaries fit the per-chip tile budget."""
    per_row = max(d, 1) * (4 * itemsize + 3 * 4)   # 2x in + 2x out + f32 temps
    cap = _tile_budget() // per_row
    cap = max(16, min(1024, (cap // 16) * 16))
    return min(cap, _round_up(n_rows, 16))


def _stats_feat_tile(d):
    """Feature tile for the BN stats pass.
    v5e/v6e (one TensorCore): full width -> contiguous DMA, fewer grid steps.
    v7x (two TensorCores): split into >=2 lane-aligned blocks when possible so
    both cores work on the reduction."""
    if _chip_is_v7x() and d >= 256 and d % 128 == 0:
        tn = min(((d // 2) // 128) * 128, 512)
        while tn >= 128 and d % tn != 0:
            tn -= 128
        if 128 <= tn < d:
            return tn
        # TODO(synk): for awkward D on v7x one TC idles during the stats pass.
    return d


# ----------------------------- kernels ------------------------------------- #

def _layernorm_kernel(x_ref, w_ref, b_ref, o_ref, *, eps):
    x = x_ref[...].astype(jnp.float32)
    d = x.shape[-1]
    mean = jnp.sum(x, axis=-1, keepdims=True) * (1.0 / d)
    xc = x - mean                                   # centered pass: VMEM-resident,
    var = jnp.sum(xc * xc, axis=-1, keepdims=True) * (1.0 / d)  # no extra HBM traffic
    inv = jax.lax.rsqrt(var + eps)
    w = w_ref[...].astype(jnp.float32)
    b = b_ref[...].astype(jnp.float32)
    o_ref[...] = (xc * inv * w + b).astype(o_ref.dtype)


def _scalenorm_kernel(x_ref, g_ref, o_ref, *, eps):
    x = x_ref[...].astype(jnp.float32)
    sumsq = jnp.sum(x * x, axis=-1, keepdims=True)
    # clamp(norm, min=eps) == clamp(sumsq, min=eps^2) before rsqrt (EUP, no divide)
    inv = jax.lax.rsqrt(jnp.maximum(sumsq, eps * eps))
    g = g_ref[0]                                    # scalar from SMEM
    o_ref[...] = (x * (g * inv)).astype(o_ref.dtype)


def _bn_stats_kernel(x_ref, w_ref, b_ref, scale_ref, shift_ref, sum_sc, sq_sc,
                     *, n_rows, tm, eps):
    # grid = (feature_blocks [parallel], row_tiles [arbitrary, reduction])
    i = pl.program_id(1)
    last = pl.num_programs(1) - 1

    @pl.when(i == 0)
    def _():
        sum_sc[...] = jnp.zeros_like(sum_sc)
        sq_sc[...] = jnp.zeros_like(sq_sc)

    @pl.when(i != last)
    def _():
        x = x_ref[...].astype(jnp.float32)
        sum_sc[...] += jnp.sum(x, axis=0, keepdims=True)
        sq_sc[...] += jnp.sum(x * x, axis=0, keepdims=True)

    @pl.when(i == last)
    def _():
        # Ragged tail: rows past N in the final (partial) block hold garbage,
        # so mask them out of the accumulation.
        x = x_ref[...].astype(jnp.float32)
        rows_left = n_rows - i * tm
        row_id = jax.lax.broadcasted_iota(jnp.int32, x.shape, 0)
        x = jnp.where(row_id < rows_left, x, 0.0)
        sum_sc[...] += jnp.sum(x, axis=0, keepdims=True)
        sq_sc[...] += jnp.sum(x * x, axis=0, keepdims=True)

        inv_n = 1.0 / n_rows
        mean = sum_sc[...] * inv_n
        var = jnp.maximum(sq_sc[...] * inv_n - mean * mean, 0.0)
        # Fold normalization constants: apply pass is just x*scale + shift.
        scale = w_ref[...].astype(jnp.float32) * jax.lax.rsqrt(var + eps)
        scale_ref[...] = scale
        shift_ref[...] = b_ref[...].astype(jnp.float32) - mean * scale


def _bn_apply_kernel(x_ref, scale_ref, shift_ref, o_ref):
    x = x_ref[...].astype(jnp.float32)
    o_ref[...] = (x * scale_ref[...] + shift_ref[...]).astype(o_ref.dtype)


# ----------------------------- wrappers ------------------------------------ #

def layer_norm(x, weight, bias, *, eps=1e-5, tile_rows=None):
    B, S, D = x.shape
    N = B * S
    x2 = x.reshape(N, D)
    tm = tile_rows or _row_tile(N, D, x.dtype.itemsize)
    out = pl.pallas_call(
        functools.partial(_layernorm_kernel, eps=eps),
        out_shape=jax.ShapeDtypeStruct((N, D), x.dtype),
        grid=(pl.cdiv(N, tm),),
        in_specs=[pl.BlockSpec((tm, D), lambda i: (i, 0)),
                  pl.BlockSpec((1, D), lambda i: (0, 0)),
                  pl.BlockSpec((1, D), lambda i: (0, 0))],
        out_specs=pl.BlockSpec((tm, D), lambda i: (i, 0)),
        compiler_params=pltpu.CompilerParams(
            dimension_semantics=("parallel",),
            vmem_limit_bytes=_vmem_limit()),
    )(x2, weight.reshape(1, D), bias.reshape(1, D))
    return out.reshape(B, S, D)


def scale_norm(x, g, *, eps=1e-5, tile_rows=None):
    B, S, D = x.shape
    N = B * S
    x2 = x.reshape(N, D)
    tm = tile_rows or _row_tile(N, D, x.dtype.itemsize)
    out = pl.pallas_call(
        functools.partial(_scalenorm_kernel, eps=eps),
        out_shape=jax.ShapeDtypeStruct((N, D), x.dtype),
        grid=(pl.cdiv(N, tm),),
        in_specs=[pl.BlockSpec((tm, D), lambda i: (i, 0)),
                  pl.BlockSpec(memory_space=pltpu.MemorySpace.SMEM)],
        out_specs=pl.BlockSpec((tm, D), lambda i: (i, 0)),
        compiler_params=pltpu.CompilerParams(
            dimension_semantics=("parallel",),
            vmem_limit_bytes=_vmem_limit()),
    )(x2, g.reshape(1).astype(jnp.float32))
    return out.reshape(B, S, D)


def batch_norm(x, weight, bias, *, eps=1e-5, tile_rows=None):
    B, S, D = x.shape
    N = B * S
    x2 = x.reshape(N, D)
    itemsize = x.dtype.itemsize
    limit = _vmem_limit()

    # ---- pass 1: per-feature scale/shift (tiled reduction over rows) -------
    tn = _stats_feat_tile(D)
    tm_s = tile_rows or _row_tile(N, tn, itemsize)
    scale, shift = pl.pallas_call(
        functools.partial(_bn_stats_kernel, n_rows=N, tm=tm_s, eps=eps),
        out_shape=(jax.ShapeDtypeStruct((1, D), jnp.float32),
                   jax.ShapeDtypeStruct((1, D), jnp.float32)),
        grid=(D // tn, pl.cdiv(N, tm_s)),
        in_specs=[pl.BlockSpec((tm_s, tn), lambda j, i: (i, j)),
                  pl.BlockSpec((1, tn), lambda j, i: (0, j)),
                  pl.BlockSpec((1, tn), lambda j, i: (0, j))],
        out_specs=(pl.BlockSpec((1, tn), lambda j, i: (0, j)),
                   pl.BlockSpec((1, tn), lambda j, i: (0, j))),
        scratch_shapes=[pltpu.VMEM((1, tn), jnp.float32),
                        pltpu.VMEM((1, tn), jnp.float32)],
        compiler_params=pltpu.CompilerParams(
            dimension_semantics=("parallel", "arbitrary"),
            vmem_limit_bytes=limit),
    )(x2, weight.reshape(1, D), bias.reshape(1, D))

    # ---- pass 2: o = x*scale + shift; 1-D rows-parallel, full-width blocks -
    tm = tile_rows or _row_tile(N, D, itemsize)
    out = pl.pallas_call(
        _bn_apply_kernel,
        out_shape=jax.ShapeDtypeStruct((N, D), x.dtype),
        grid=(pl.cdiv(N, tm),),
        in_specs=[pl.BlockSpec((tm, D), lambda i: (i, 0)),
                  pl.BlockSpec((1, D), lambda i: (0, 0)),
                  pl.BlockSpec((1, D), lambda i: (0, 0))],
        out_specs=pl.BlockSpec((tm, D), lambda i: (i, 0)),
        compiler_params=pltpu.CompilerParams(
            dimension_semantics=("parallel",),
            vmem_limit_bytes=limit),
    )(x2, scale, shift)
    return out.reshape(B, S, D)


class Normalization:
    """JAX/Pallas port of the PyTorch `Normalization` module (forward pass)."""

    def __init__(self, method, d_model=None):
        assert method in ['layer', 'scale', 'batch', 'power', 'none']
        self.method = method
        self.d_model = d_model
        if method in ('layer', 'batch'):
            assert d_model
            # PyTorch defaults: weight=1, bias=0.
            self.weight = jnp.ones((d_model,), jnp.float32)
            self.bias = jnp.zeros((d_model,), jnp.float32)
            # TODO(synk): BatchNorm1d running_mean / running_var (inference
            # mode, momentum update) are not tracked; training-mode batch
            # statistics only.
        elif method == 'scale':
            assert d_model
            # ScaleNorm g initialized to sqrt(d_model) (standard init).
            self.g = jnp.array(math.sqrt(d_model), jnp.float32)
        elif method == 'power':
            # TODO(synk): MaskPowerNorm implementation not available; not faked.
            raise NotImplementedError("MaskPowerNorm has no reference source")

    def __call__(self, x):
        if self.method == 'layer':
            return layer_norm(x, self.weight, self.bias)
        if self.method == 'scale':
            return scale_norm(x, self.g)
        if self.method == 'batch':
            # PyTorch: norm(x.transpose(-1,1)).transpose(-1,1) — equivalent to
            # normalizing each feature over all B*S rows.
            return batch_norm(x, self.weight, self.bias)
        return x  # 'none'


# ----------------------------- references ---------------------------------- #

def _layer_ref(x, w, b, eps=1e-5):
    m = jnp.mean(x, -1, keepdims=True)
    v = jnp.mean((x - m) ** 2, -1, keepdims=True)
    return (x - m) * jax.lax.rsqrt(v + eps) * w + b


def _scale_ref(x, g, eps=1e-5):
    n = jnp.maximum(jnp.linalg.norm(x, axis=-1, keepdims=True), eps)
    return g * x / n


def _batch_ref(x, w, b, eps=1e-5):
    B, S, D = x.shape
    x2 = x.reshape(-1, D)
    m = jnp.mean(x2, 0, keepdims=True)
    v = jnp.mean((x2 - m) ** 2, 0, keepdims=True)
    return (((x2 - m) * jax.lax.rsqrt(v + eps)) * w + b).reshape(B, S, D)


# ------------------------------- main --------------------------------------- #

if __name__ == "__main__":
    ok = True

    # Canonical small shape.
    B, S, D = 2, 8, 32
    x = jax.random.normal(jax.random.PRNGKey(0), (B, S, D), dtype=jnp.float32)

    ln = Normalization('layer', d_model=D)
    y = jax.block_until_ready(ln(x))
    ok &= bool(jnp.allclose(y, _layer_ref(x, ln.weight, ln.bias), atol=1e-4, rtol=1e-4))

    sn = Normalization('scale', d_model=D)
    y = jax.block_until_ready(sn(x))
    ok &= bool(jnp.allclose(y, _scale_ref(x, sn.g), atol=1e-4, rtol=1e-4))

    bn = Normalization('batch', d_model=D)
    y = jax.block_until_ready(bn(x))
    ok &= bool(jnp.allclose(y, _batch_ref(x, bn.weight, bn.bias), atol=1e-4, rtol=1e-4))

    nn_ = Normalization('none')
    ok &= bool(jnp.allclose(jax.block_until_ready(nn_(x)), x))

    # Ragged-row check: N = B*S not a multiple of the row tile.  Forces a
    # partial final block (layer/scale/BN-apply) and the masked tail in the
    # BN stats pass; verifies only valid rows are written / accumulated.
    Br, Sr = 5, 9   # N = 45, tile_rows = 16 -> 3 row tiles, last has 13 rows
    xr = jax.random.normal(jax.random.PRNGKey(1), (Br, Sr, D), dtype=jnp.float32)
    yr = jax.block_until_ready(layer_norm(xr, ln.weight, ln.bias, tile_rows=16))
    ok &= bool(jnp.allclose(yr, _layer_ref(xr, ln.weight, ln.bias), atol=1e-4, rtol=1e-4))
    yr = jax.block_until_ready(scale_norm(xr, sn.g, tile_rows=16))
    ok &= bool(jnp.allclose(yr, _scale_ref(xr, sn.g), atol=1e-4, rtol=1e-4))
    yr = jax.block_until_ready(batch_norm(xr, bn.weight, bn.bias, tile_rows=16))
    ok &= bool(jnp.allclose(yr, _batch_ref(xr, bn.weight, bn.bias), atol=1e-4, rtol=1e-4))

    print("KERNEL_OK" if ok else "KERNEL_MISMATCH")
</pallas_src>

<mosaic_0001>
module attributes {stable_mosaic.version = 11 : i64} {
  func.func @_layernorm_kernel(%arg0: i32, %arg1: memref<16x32xf32, #tpu.memory_space<vmem>>, %arg2: memref<1x32xf32, #tpu.memory_space<vmem>>, %arg3: memref<1x32xf32, #tpu.memory_space<vmem>>, %arg4: memref<16x32xf32, #tpu.memory_space<vmem>>) attributes {dimension_semantics = [#tpu.dimension_semantics<parallel>], iteration_bounds = array<i64: 1>, scalar_prefetch = 0 : i64, scratch_operands = 0 : i64, tpu.core_type = #tpu.core_type<tc>, window_params = [{transform_indices = @transform_0, window_bounds = array<i64: 16, 32>}, {pipeline_mode = #tpu.pipeline_mode<synchronous>, transform_indices = @transform_1, window_bounds = array<i64: 1, 32>}, {pipeline_mode = #tpu.pipeline_mode<synchronous>, transform_indices = @transform_2, window_bounds = array<i64: 1, 32>}, {transform_indices = @transform_3, window_bounds = array<i64: 16, 32>}]} {
    %c0 = arith.constant 0 : index
    %c0_0 = arith.constant 0 : index
    %0 = vector.load %arg1[%c0, %c0_0] : memref<16x32xf32, #tpu.memory_space<vmem>>, vector<16x32xf32>
    %cst = arith.constant dense<0.000000e+00> : vector<16xf32>
    %1 = vector.multi_reduction <add>, %0, %cst [1] : vector<16x32xf32> to vector<16xf32>
    %2 = vector.shape_cast %1 : vector<16xf32> to vector<16x1xf32>
    %cst_1 = arith.constant 3.125000e-02 : f32
    %3 = vector.broadcast %cst_1 : f32 to vector<16x1xf32>
    %4 = arith.mulf %2, %3 : vector<16x1xf32>
    %5 = vector.broadcast %4 : vector<16x1xf32> to vector<16x32xf32>
    %6 = arith.subf %0, %5 : vector<16x32xf32>
    %7 = arith.mulf %6, %6 : vector<16x32xf32>
    %cst_2 = arith.constant dense<0.000000e+00> : vector<16xf32>
    %8 = vector.multi_reduction <add>, %7, %cst_2 [1] : vector<16x32xf32> to vector<16xf32>
    %9 = vector.shape_cast %8 : vector<16xf32> to vector<16x1xf32>
    %cst_3 = arith.constant 3.125000e-02 : f32
    %10 = vector.broadcast %cst_3 : f32 to vector<16x1xf32>
    %11 = arith.mulf %9, %10 : vector<16x1xf32>
    %cst_4 = arith.constant 9.99999974E-6 : f32
    %12 = vector.broadcast %cst_4 : f32 to vector<16x1xf32>
    %13 = arith.addf %11, %12 : vector<16x1xf32>
    %14 = math.rsqrt %13 : vector<16x1xf32>
    %c0_5 = arith.constant 0 : index
    %c0_6 = arith.constant 0 : index
    %15 = vector.load %arg2[%c0_5, %c0_6] : memref<1x32xf32, #tpu.memory_space<vmem>>, vector<1x32xf32>
    %c0_7 = arith.constant 0 : index
    %c0_8 = arith.constant 0 : index
    %16 = vector.load %arg3[%c0_7, %c0_8] : memref<1x32xf32, #tpu.memory_space<vmem>>, vector<1x32xf32>
    %17 = vector.broadcast %14 : vector<16x1xf32> to vector<16x32xf32>
    %18 = arith.mulf %6, %17 : vector<16x32xf32>
    %19 = vector.broadcast %15 : vector<1x32xf32> to vector<16x32xf32>
    %20 = arith.mulf %18, %19 : vector<16x32xf32>
    %21 = vector.broadcast %16 : vector<1x32xf32> to vector<16x32xf32>
    %22 = arith.addf %20, %21 : vector<16x32xf32>
    %c0_9 = arith.constant 0 : index
    %c0_10 = arith.constant 0 : index
    %23 = vector.load %arg4[%c0_9, %c0_10] : memref<16x32xf32, #tpu.memory_space<vmem>>, vector<16x32xf32>
    tpu.vector_store %arg4[%c0_9, %c0_10], %22 {strides = array<i32>} : memref<16x32xf32, #tpu.memory_space<vmem>>, vector<16x32xf32>,
    return
  }
  func.func @transform_0(%arg0: i32) -> (i32, i32) {
    %c0_i32 = arith.constant 0 : i32
    %c0_i32_0 = arith.constant 0 : i32
    return %arg0, %c0_i32 : i32, i32
  }
  func.func @transform_1(%arg0: i32) -> (i32, i32) {
    %c0_i32 = arith.constant 0 : i32
    %c0_i32_0 = arith.constant 0 : i32
    %c0_i32_1 = arith.constant 0 : i32
    return %c0_i32, %c0_i32_0 : i32, i32
  }
  func.func @transform_2(%arg0: i32) -> (i32, i32) {
    %c0_i32 = arith.constant 0 : i32
    %c0_i32_0 = arith.constant 0 : i32
    %c0_i32_1 = arith.constant 0 : i32
    return %c0_i32, %c0_i32_0 : i32, i32
  }
  func.func @transform_3(%arg0: i32) -> (i32, i32) {
    %c0_i32 = arith.constant 0 : i32
    %c0_i32_0 = arith.constant 0 : i32
    return %arg0, %c0_i32 : i32, i32
  }
}

</mosaic_0001>

<llo_original>
// kernel: tpu_custom_call.1
$region0: #{tpu_custom_call.1}
  #allocation0 [shape = 'u32[]', space=smem, size = 0x4, offset = 0x4, fixed_abs, tag = 'smem constant byte address 0x4 - core index']
  #allocation1 [shape = 'u32[72,128]{1,0:T(1,128)}', space=vmem, size = 0x9000, scoped, tag = 'internal scratch']
  %s0 = inlined_call_operand.hbm [shape: f32[16,32], index: 0, kind: input, shape index: {}]
  %s1 = inlined_call_operand.hbm [shape: f32[1,32], index: 1, kind: input, shape index: {}]
  %s2 = inlined_call_operand.vmem [shape: f32[1,32], index: 2, kind: input, shape index: {}]
  %s3 = inlined_call_operand.hbm [shape: f32[16,32], index: 3, kind: output, shape index: {}]
  %s4 = sld [smem:[#allocation0]]
  $region30: #{tpu_custom_call.1} parent=0
    _
  %s6 = ssub.s32 1, %s4
  %s7 = scalar_select 0, %s6, %s4
  $region1: #{tpu_custom_call.1} parent=0
    #allocation2 [shape = 'u8[8192]{0}', space=vmem, size = 0x2000, scoped, tag = 'input window, operand 0, single buffered']
    #allocation3 [shape = 's32[1]{0}', space=sflag, size = 0x4, scoped, tag = 'scoped memory for tpu_custom_call.1']
    #allocation4 [shape = 's32[1]{0}', space=sflag, size = 0x4, scoped, tag = 'scoped memory for tpu_custom_call.1']
    #allocation5 [shape = 'u8[512]{0}', space=vmem, size = 0x400, scoped, tag = 'input window, operand 1, single buffered']
    #allocation6 [shape = 's32[1]{0}', space=sflag, size = 0x4, scoped, tag = 'scoped memory for tpu_custom_call.1']
    #allocation7 [shape = 'u8[8192]{0}', space=vmem, size = 0x2000, scoped, tag = 'output window, operand 0, single buffered']
    %8 = vsyncpa [#allocation3], 0
    %9 = vsyncpa [#allocation6], 0
    %10 = vsyncpa [#allocation4], 0
    // Predicated region
    $region2: #{tpu_custom_call.1} parent=1 // pred_check
      _
    $region3: #{tpu_custom_call.1} parent=1 // pred_check_branch
      %12 = sbr.rel (0) target = $region5
    $region4: #{tpu_custom_call.1} parent=1 // pred_region
      %14 = vsyncadd [#allocation3], 0
      %s15 = sshll.u32 %s0, 4
      %s16 = int_to_ptr.hbm [resolvable:$true] %s15
      %s17 = sshll.u32 [#allocation2], 4
      %s18 = int_to_ptr.vmem [resolvable:$true] %s17
      %23 = dma.hbm_to_vmem [thread:$0]  %s16, 256, %s18, [#allocation3], 128, 128, 8
    $region5: #{tpu_custom_call.1} parent=1 // pred_fallthru
      _
    // Predicated region
    $region6: #{tpu_custom_call.1} parent=1 // pred_check
      _
    $region7: #{tpu_custom_call.1} parent=1 // pred_check_branch
      %25 = sbr.rel (0) target = $region9
    $region8: #{tpu_custom_call.1} parent=1 // pred_region
      %27 = vsyncadd [#allocation6], 0
      %s29 = sshll.u32 %s1, 4
      %s30 = int_to_ptr.hbm [resolvable:$true] %s29
      %s31 = sshll.u32 [#allocation5], 4
      %s32 = int_to_ptr.vmem [resolvable:$true] %s31
      %34 = dma.hbm_to_vmem [thread:$0]  %s30, 16, %s32, [#allocation6]
    $region9: #{tpu_custom_call.1} parent=1 // pred_fallthru
      _
    // Predicated region
    $region10: #{tpu_custom_call.1} parent=1 // pred_check
      _
    $region11: #{tpu_custom_call.1} parent=1 // pred_check_branch
      %36 = sbr.rel (0) target = $region13
    $region12: #{tpu_custom_call.1} parent=1 // pred_region
      _
    $region13: #{tpu_custom_call.1} parent=1 // pred_fallthru
      _
    // Predicated region
    $region14: #{tpu_custom_call.1} parent=1 // pred_check
      _
    $region15: #{tpu_custom_call.1} parent=1 // pred_check_branch
      %38 = sbr.rel (0) target = $region17
    $region16: #{tpu_custom_call.1} parent=1 // pred_region
      %40 = dma.done [#allocation3], 256
    $region17: #{tpu_custom_call.1} parent=1 // pred_fallthru
      _
    // Predicated region
    $region18: #{tpu_custom_call.1} parent=1 // pred_check
      _
    $region19: #{tpu_custom_call.1} parent=1 // pred_check_branch
      %42 = sbr.rel (0) target = $region21
    $region20: #{tpu_custom_call.1} parent=1 // pred_region
      %44 = dma.done [#allocation6], 16
    $region21: #{tpu_custom_call.1} parent=1 // pred_fallthru
      _
    %v45 = vld [vmem:[#allocation2] sm:$0xff]
    %v46 = vld [vmem:[#allocation2 + $0x8] sm:$0xff]
    %vm47 = vcmask 261120
    %v48 = vsel %vm47, %v45, 0.0
    %49 = vadd.xlane.f32.xlu0 %v48
    %v50 = vpop.xlane.xlu0 %49
    %v51 = vsel %vm47, %v46, 0.0
    %52 = vadd.xlane.f32.xlu0 %v51
    %v53 = vpop.xlane.xlu0 %52
    %v54 = vmul.f32 %v50, 0.03125
    %v55 = vmul.f32 %v53, 0.03125
    %v56 = vsub.f32 %v45, %v54
    %v57 = vsub.f32 %v46, %v55
    %v58 = vmul.f32 %v56, %v56
    %v59 = vmul.f32 %v57, %v57
    %v60 = vsel %vm47, %v58, 0.0
    %61 = vadd.xlane.f32.xlu0 %v60
    %v62 = vpop.xlane.xlu0 %61
    %v63 = vsel %vm47, %v59, 0.0
    %64 = vadd.xlane.f32.xlu0 %v63
    %v65 = vpop.xlane.xlu0 %64
    %v66 = vmul.f32 %v62, 0.03125
    %v67 = vmul.f32 %v65, 0.03125
    %v68 = vadd.f32 %v66, 1e-05
    %v69 = vadd.f32 %v67, 1e-05
    %v70 = vrsqrt.pop %v68
    %v71 = vmul.f32 %v70, %v68
    %v72 = vmul.f32 %v71, %v70
    %v73 = vmul.f32 0.5, %v72
    %v74 = vsub.f32 1.5, %v73
    %v75 = vmul.f32 %v70, %v74
    %vm76 = vweird.f32 %v68
    %vm77 = vweird.f32 %v70
    %vm78 = vmor %vm76, %vm77
    %v79 = vsel %vm78, %v70, %v75
    %v80 = vrsqrt.pop %v69
    %v81 = vmul.f32 %v80, %v69
    %v82 = vmul.f32 %v81, %v80
    %v83 = vmul.f32 0.5, %v82
    %v84 = vsub.f32 1.5, %v83
    %v85 = vmul.f32 %v80, %v84
    %vm86 = vweird.f32 %v69
    %vm87 = vweird.f32 %v80
    %vm88 = vmor %vm86, %vm87
    %v89 = vsel %vm88, %v80, %v85
    %v90 = vld [vmem:[#allocation5] sm:$0x1]
    %v91 = vld [vmem:[%s2] sm:$0x1]
    %v92 = vmul.f32 %v56, %v79
    %v93 = vmul.f32 %v57, %v89
    %v95 = vperm.slane %v90, 0
    %v97 = vmul.f32 %v92, %v95
    %v98 = vmul.f32 %v93, %v95
    %v100 = vperm.slane %v91, 0
    %v102 = vadd.f32 %v97, %v100
    %v103 = vadd.f32 %v98, %v100
    %104 = vst.msk [vmem:[#allocation7] sm:$0xff] %vm47, %v102
    %105 = vst.msk [vmem:[#allocation7 + $0x8] sm:$0xff] %vm47, %v103
    // Predicated region
    $region22: #{tpu_custom_call.1} parent=1 // pred_check
      _
    $region23: #{tpu_custom_call.1} parent=1 // pred_check_branch
      %107 = sbr.rel (0) target = $region25
    $region24: #{tpu_custom_call.1} parent=1 // pred_region
      %109 = vsyncadd [#allocation4], 0
      %s110 = sshll.u32 [#allocation7], 4
      %s111 = int_to_ptr.vmem [resolvable:$true] %s110
      %s112 = sshll.u32 %s3, 4
      %s113 = int_to_ptr.hbm [resolvable:$true] %s112
      %118 = dma.vmem_to_hbm [thread:$0]  %s111, 256, %s113, [#allocation4], 128, 128, 8
    $region25: #{tpu_custom_call.1} parent=1 // pred_fallthru
      _
    // Predicated region
    $region26: #{tpu_custom_call.1} parent=1 // pred_check
      _
    $region27: #{tpu_custom_call.1} parent=1 // pred_check_branch
      %120 = sbr.rel (0) target = $region29
    $region28: #{tpu_custom_call.1} parent=1 // pred_region
      %122 = dma.done [#allocation4], 256
    $region29: #{tpu_custom_call.1} parent=1 // pred_fallthru
      _
    %123 = vsyncpa [#allocation3], 1
    %124 = vsyncpa [#allocation6], 1
    %125 = vsyncpa [#allocation4], 1

</llo_original>
